<compile_context>
chip_gen: v6e
topology: v6e:2x2x1
jax: 0.10.0
libtpu: 0.0.40
codegen_flags: <defaults>
</compile_context>

<pallas_src>
import jax
import jax.numpy as jnp
from jax.experimental import pallas as pl
from jax.experimental.pallas import tpu as pltpu

_LANE = 128


def _cdiv(a, b):
    return (a + b - 1) // b


def _round_up(x, m):
    return ((x + m - 1) // m) * m


def _sublane_multiple(dtype):
    # packed sublane multiple: f32 -> 8, bf16 -> 16, int8/fp8 -> 32
    itemsize = jnp.dtype(dtype).itemsize
    return max(8, 32 // itemsize)


# ----------------------------------------------------------------------------
# Kernel
# ----------------------------------------------------------------------------
def _noise_injection_kernel(w_ref, img_ref, noise_ref, out_ref):
    # w_ref    : SMEM (1,)          f32 scalar weight
    # img_ref  : VMEM (1, CBLK, HW) image slab (full H*W in lanes)
    # noise_ref: VMEM (1, 1,   HW)  noise slab; same block index for every channel
    #                               block of a batch -> DMA reused, broadcast over C
    # out_ref  : VMEM (1, CBLK, HW)
    img = img_ref[...].astype(jnp.float32)
    nz = noise_ref[...].astype(jnp.float32)
    out_ref[...] = (img + w_ref[0] * nz).astype(out_ref.dtype)


# ----------------------------------------------------------------------------
# Wrapper
# ----------------------------------------------------------------------------
def _choose_cblk(C, hw, itemsize, sub_mult, vmem_budget_bytes):
    # Double-buffered image-in + output tiles ~= 4 * CBLK * hw * itemsize.
    max_cblk = vmem_budget_bytes // (4 * hw * itemsize)
    if C <= max_cblk:
        return C                                   # full channel axis (no alignment needed)
    return max(sub_mult, (max_cblk // sub_mult) * sub_mult)


def noise_injection(image, weight, noise=None, *, seed=0, cblk=None,
                    vmem_budget_bytes=6 * 1024 * 1024):
    """Pallas TPU implementation of NoiseInjection.forward.

    image : (B, C, H, W)
    weight: scalar or (1,) learned parameter (init 0)
    noise : optional (B, 1, H, W).  If None, drawn ~N(0,1) from PRNGKey(seed)
            (same semantics as the PyTorch module's .normal_()).
    """
    B, C, H, W = image.shape
    hw = H * W
    dtype = image.dtype
    itemsize = jnp.dtype(dtype).itemsize
    sub_mult = _sublane_multiple(dtype)

    if noise is None:
        noise = jax.random.normal(jax.random.PRNGKey(seed), (B, 1, H, W),
                                  dtype=jnp.float32)
    noise_itemsize = jnp.dtype(noise.dtype).itemsize

    # Free, contiguous reshape: no padding, no extra HBM pass.
    img2 = image.reshape(B, C, hw)
    nz2 = noise.reshape(B, 1, hw)

    if cblk is None:
        cblk = _choose_cblk(C, hw, itemsize, sub_mult, vmem_budget_bytes)
        # v7x has 2 TensorCores: make sure the parallel grid has >= 2 steps when
        # a single (B=1, one channel block) step would otherwise run on one core.
        if B == 1 and cblk >= C and C >= 2 * sub_mult:
            cblk = _round_up(_cdiv(C, 2), sub_mult)
    cblk = min(cblk, C)
    n_cblk = _cdiv(C, cblk)

    w = jnp.asarray(weight, dtype=jnp.float32).reshape(1)

    # Channel-block axis last (fastest varying) => the noise block index (b, 0, 0)
    # is unchanged between consecutive steps and Pallas reuses that DMA.
    grid = (B, n_cblk)
    img_spec = pl.BlockSpec((1, cblk, hw), lambda b, c: (b, c, 0))
    noise_spec = pl.BlockSpec((1, 1, hw), lambda b, c: (b, 0, 0))
    out_spec = pl.BlockSpec((1, cblk, hw), lambda b, c: (b, c, 0))
    out_shape = jax.ShapeDtypeStruct((B, C, hw), dtype)

    # Only raise the scoped-VMEM limit if the footprint would not fit the smallest
    # default (v5e: 16 MiB); otherwise keep the per-chip default.
    footprint = 4 * cblk * hw * itemsize + 2 * hw * noise_itemsize
    vmem_limit = None
    if footprint + (4 << 20) > (16 << 20):
        vmem_limit = int(min(footprint + (4 << 20), 96 << 20))

    cparams = pltpu.CompilerParams(
        dimension_semantics=("parallel", "parallel"),   # v7x: shard over 2 TCs
        vmem_limit_bytes=vmem_limit,
    )
    cost = pl.CostEstimate(
        flops=2 * B * C * hw,
        transcendentals=0,
        bytes_accessed=2 * B * C * hw * itemsize + B * hw * noise_itemsize,
    )

    out = pl.pallas_call(
        _noise_injection_kernel,
        out_shape=out_shape,
        grid=grid,
        in_specs=[
            pl.BlockSpec(memory_space=pltpu.SMEM),  # weight (scalar)
            img_spec,                               # image slab
            noise_spec,                             # noise slab (broadcast over C)
        ],
        out_specs=out_spec,
        compiler_params=cparams,
        cost_estimate=cost,
    )(w, img2, nz2)

    return out.reshape(B, C, H, W)


if __name__ == "__main__":
    key = jax.random.PRNGKey(0)
    k_img, k_noise, k_img2, k_img3 = jax.random.split(key, 4)

    B, C, H, W = 2, 4, 16, 16
    image = jax.random.normal(k_img, (B, C, H, W), dtype=jnp.float32)
    noise = jax.random.normal(k_noise, (B, 1, H, W), dtype=jnp.float32)

    # Module init: self.weight = nn.Parameter(torch.zeros(1))
    weight_init = jnp.zeros((1,), dtype=jnp.float32)      # faithful init
    weight_test = jnp.asarray([0.5], dtype=jnp.float32)   # nonzero check

    # 1) faithful init: weight = 0 -> out == image
    out0 = noise_injection(image, weight_init, noise)
    jax.block_until_ready(out0)
    assert jnp.allclose(out0, image, atol=1e-6)

    # 2) nonzero weight with supplied noise vs pure-JAX reference
    out1 = noise_injection(image, weight_test, noise)
    jax.block_until_ready(out1)
    ref1 = image + weight_test[0] * noise    # broadcast (B,1,H,W) over C
    assert jnp.allclose(out1, ref1, atol=1e-6)

    # 3) noise=None path: N(0,1) drawn from PRNGKey(seed), broadcast over C, deterministic
    out2 = noise_injection(image, weight_test, noise=None, seed=1234)
    out2b = noise_injection(image, weight_test, noise=None, seed=1234)
    jax.block_until_ready((out2, out2b))
    d = (out2 - image) / weight_test[0]
    assert bool(jnp.all(jnp.isfinite(out2)))
    assert jnp.allclose(d, d[:, :1], atol=1e-5)          # identical across channels
    assert 0.5 < float(jnp.std(d[:, 0])) < 1.5
    assert abs(float(jnp.mean(d[:, 0]))) < 0.5
    assert jnp.allclose(out2, out2b)                      # determinism

    # 4) non-divisible channel count with explicit cblk (partial last block, masked writes)
    C2 = 12
    image2 = jax.random.normal(k_img2, (B, C2, H, W), dtype=jnp.float32)
    out3 = noise_injection(image2, weight_test, noise, cblk=8)
    jax.block_until_ready(out3)
    assert jnp.allclose(out3, image2 + weight_test[0] * noise, atol=1e-6)

    # 5) ragged H*W (not a multiple of 128): no wrapper pad/slice, full-dim lane block
    H2, W2 = 10, 10
    image3 = jax.random.normal(k_img3, (B, C, H2, W2), dtype=jnp.float32)
    noise3 = jax.random.normal(k_noise, (B, 1, H2, W2), dtype=jnp.float32)
    out4 = noise_injection(image3, weight_test, noise3)
    jax.block_until_ready(out4)
    assert jnp.allclose(out4, image3 + weight_test[0] * noise3, atol=1e-6)

    # 6) bf16 image: math in f32 in-kernel (no wrapper-side noise astype), cast on store
    image_bf = image.astype(jnp.bfloat16)
    out5 = noise_injection(image_bf, weight_test, noise)
    jax.block_until_ready(out5)
    ref5 = (image_bf.astype(jnp.float32) + weight_test[0] * noise).astype(jnp.bfloat16)
    assert jnp.allclose(out5.astype(jnp.float32), ref5.astype(jnp.float32), atol=1e-2)

    print("KERNEL_OK")
</pallas_src>

<mosaic_0001>
module attributes {stable_mosaic.version = 11 : i64} {
  func.func @_noise_injection_kernel(%arg0: i32, %arg1: i32, %arg2: memref<1xf32, #tpu.memory_space<smem>>, %arg3: memref<1x4x256xf32, #tpu.memory_space<vmem>>, %arg4: memref<1x1x256xf32, #tpu.memory_space<vmem>>, %arg5: memref<1x4x256xf32, #tpu.memory_space<vmem>>) attributes {dimension_semantics = [#tpu.dimension_semantics<parallel>, #tpu.dimension_semantics<parallel>], iteration_bounds = array<i64: 2, 1>, scalar_prefetch = 0 : i64, scratch_operands = 0 : i64, tpu.core_type = #tpu.core_type<tc>, window_params = [{transform_indices = @transform_0, window_bounds = array<i64: 1>}, {transform_indices = @transform_1, window_bounds = array<i64: 1, 4, 256>}, {transform_indices = @transform_2, window_bounds = array<i64: 1, 1, 256>}, {transform_indices = @transform_3, window_bounds = array<i64: 1, 4, 256>}]} {
    %c0 = arith.constant 0 : index
    %c0_0 = arith.constant 0 : index
    %c0_1 = arith.constant 0 : index
    %0 = vector.load %arg3[%c0, %c0_0, %c0_1] : memref<1x4x256xf32, #tpu.memory_space<vmem>>, vector<1x4x256xf32>
    %c0_2 = arith.constant 0 : index
    %c0_3 = arith.constant 0 : index
    %c0_4 = arith.constant 0 : index
    %1 = vector.load %arg4[%c0_2, %c0_3, %c0_4] : memref<1x1x256xf32, #tpu.memory_space<vmem>>, vector<1x1x256xf32>
    %c0_5 = arith.constant 0 : index
    %2 = memref.load %arg2[%c0_5] : memref<1xf32, #tpu.memory_space<smem>>
    %3 = vector.broadcast %2 : f32 to vector<1x1x256xf32>
    %4 = arith.mulf %3, %1 : vector<1x1x256xf32>
    %5 = vector.broadcast %4 : vector<1x1x256xf32> to vector<1x4x256xf32>
    %6 = arith.addf %0, %5 : vector<1x4x256xf32>
    %c0_6 = arith.constant 0 : index
    %c0_7 = arith.constant 0 : index
    %c0_8 = arith.constant 0 : index
    %7 = vector.load %arg5[%c0_6, %c0_7, %c0_8] : memref<1x4x256xf32, #tpu.memory_space<vmem>>, vector<1x4x256xf32>
    tpu.vector_store %arg5[%c0_6, %c0_7, %c0_8], %6 {strides = array<i32>} : memref<1x4x256xf32, #tpu.memory_space<vmem>>, vector<1x4x256xf32>,
    return
  }
  func.func @transform_0(%arg0: i32, %arg1: i32) -> i32 {
    %c0_i32 = arith.constant 0 : i32
    %c0_i32_0 = arith.constant 0 : i32
    return %c0_i32 : i32
  }
  func.func @transform_1(%arg0: i32, %arg1: i32) -> (i32, i32, i32) {
    %c0_i32 = arith.constant 0 : i32
    %c0_i32_0 = arith.constant 0 : i32
    return %arg0, %arg1, %c0_i32 : i32, i32, i32
  }
  func.func @transform_2(%arg0: i32, %arg1: i32) -> (i32, i32, i32) {
    %c0_i32 = arith.constant 0 : i32
    %c0_i32_0 = arith.constant 0 : i32
    %c0_i32_1 = arith.constant 0 : i32
    return %arg0, %c0_i32, %c0_i32_0 : i32, i32, i32
  }
  func.func @transform_3(%arg0: i32, %arg1: i32) -> (i32, i32, i32) {
    %c0_i32 = arith.constant 0 : i32
    %c0_i32_0 = arith.constant 0 : i32
    return %arg0, %arg1, %c0_i32 : i32, i32, i32
  }
}

</mosaic_0001>

<llo_original>
// kernel: tpu_custom_call.1
$region0: #{tpu_custom_call.1}
  #allocation0 [shape = 'u32[]', space=smem, size = 0x4, offset = 0x4, fixed_abs, tag = 'smem constant byte address 0x4 - core index']
  #allocation1 [shape = 'u32[144,128]{1,0:T(1,128)}', space=vmem, size = 0x12000, scoped, tag = 'internal scratch']
  #allocation2 [shape = 'f32[1]{0:T(128)S(6)}', space=smem, size = 0x200, scoped, tag = 'scoped memory for tpu_custom_call.1']
  %s0 = inlined_call_operand.<no memory space> [shape: f32[1], index: 0, kind: input, shape index: {}]
  %s1 = inlined_call_operand.hbm [shape: f32[2,4,256], index: 1, kind: input, shape index: {}]
  %s2 = inlined_call_operand.hbm [shape: f32[2,1,256], index: 2, kind: input, shape index: {}]
  %s3 = inlined_call_operand.hbm [shape: f32[2,4,256], index: 3, kind: output, shape index: {}]
  %s4 = sld [smem:[#allocation0]]
  $region53: #{tpu_custom_call.1} parent=0
    _
  %s6 = ssub.s32 1, %s4
  %s7 = scalar_select 0, %s6, %s4
  %8 = sst [smem:[#allocation2]] %s0
  $region1: #{tpu_custom_call.1} parent=0
    #allocation3 [shape = 'u8[8192]{0}', space=vmem, size = 0x2000, scoped, tag = 'input window, operand 1']
    #allocation4 [shape = 's32[2]{0}', space=sflag, size = 0x8, scoped, tag = 'scoped memory for tpu_custom_call.1']
    #allocation5 [shape = 's32[2]{0}', space=sflag, size = 0x8, scoped, tag = 'scoped memory for tpu_custom_call.1']
    #allocation6 [shape = 'u8[2048]{0}', space=vmem, size = 0x800, scoped, tag = 'input window, operand 2']
    #allocation7 [shape = 's32[2]{0}', space=sflag, size = 0x8, scoped, tag = 'scoped memory for tpu_custom_call.1']
    #allocation8 [shape = 'u8[8192]{0}', space=vmem, size = 0x2000, scoped, tag = 'output window, operand 0']
    %9 = vsyncpa [#allocation4], 0
    %s10 = scalar_lea.sflag [#allocation4], 1
    %11 = vsyncpa %s10, 0
    %12 = vsyncpa [#allocation7], 0
    %s13 = scalar_lea.sflag [#allocation7], 1
    %14 = vsyncpa %s13, 0
    %15 = vsyncpa [#allocation5], 0
    %s16 = scalar_lea.sflag [#allocation5], 1
    %17 = vsyncpa %s16, 0
    loop: start=0, step=1, limit=4
    $region2: #{tpu_custom_call.1} parent=1 // loop_pre_header
      _
    $region3: #{tpu_custom_call.1} parent=1 // loop_header
      %s19 = sphi 0, %s23
      %p20 = scmp.ge.s32.totalorder %s19, 4
      %s26 = sphi 0, %s38
      %s27 = sphi 0, %s34
      %s28 = sphi 0, %s26
      %s29 = sphi 0, %s27
      %s30 = sphi 0, %s28
      %s31 = sphi 0, %s29
      %s39 = sphi 0, %s39
      %s41 = sphi 0, %s39
      %s42 = sphi 0, %s41
      %s56 = sphi 0, %s42
      %s64 = sphi 0, %s66
      %s67 = sphi 0, %s64
      %s68 = sphi 0, %s67
      %s84 = sphi 0, %s68
      %s90 = sphi 0, %s92
      %s93 = sphi 0, %s90
      %s94 = sphi 0, %s93
      %s110 = sphi 0, %s94
      %s118 = sphi 0, %s120
      %s121 = sphi 0, %s118
      %s122 = sphi 0, %s121
      %s138 = sphi 0, %s122
    $region4: #{tpu_custom_call.1} parent=1 // loop_header_branch
      %22 = sbr.rel (%p20) target = $region8
    $region5: #{tpu_custom_call.1} parent=1 // loop_body
      %s24 = ssub.s32 %s19, 1
      %s25 = ssub.s32 %s19, 2
      %s32 = sadd.s32 1, %s27
      %p33 = scmp.ge.s32.totalorder %s32, 1
      %s34 = scalar_select %p33, 0, %s32
      %s35 = sadd.s32 1, %s26
      %s36 = scalar_select %p33, %s35, %s26
      %p37 = scmp.ge.s32.totalorder %s36, 2
      %s38 = scalar_select %p37, 0, %s36
      %s40 = sadd.s32 %s39, 1
      %p43 = scmp.eq.s32.totalorder %s19, 1
      %p44 = scmp.ne.s32.totalorder %s39, %s41
      %p45 = scmp.eq.s32.totalorder %s19, 0
      %p46 = por %p44, %p45
      %p47 = scmp.ne.s32.totalorder %s39, %s41
      %p48 = scmp.eq.s32.totalorder %s24, 1
      %p49 = por %p47, %p48
      %p50 = scmp.ne.s32.totalorder %s41, %s42
      %p51 = scmp.eq.s32.totalorder %s24, 0
      %p52 = por %p50, %p51
      %p53 = scmp.ne.s32.totalorder %s41, %s42
      %p54 = scmp.eq.s32.totalorder %s25, 1
      %p55 = por %p53, %p54
      %p57 = scmp.ne.s32.totalorder %s42, %s56
      %p58 = scmp.eq.s32.totalorder %s25, 0
      %p59 = por %p57, %p58
      %s60 = ssub.s32 %s26, %s38
      %s61 = ssub.s32 %s27, %s34
      %s62 = sor.u32 %s60, %s61
      %p63 = scmp.eq.s32.totalorder %s62, 0
      %s65 = sadd.s32 %s64, 1
      %s66 = scalar_select %p63, %s64, %s65
      %p69 = pneg %p63
      %p70 = scmp.eq.s32.totalorder %s19, 1
      %p71 = por %p69, %p70
      %p72 = scmp.ne.s32.totalorder %s64, %s67
      %p73 = scmp.eq.s32.totalorder %s19, 0
      %p74 = por %p72, %p73
      %p75 = scmp.ne.s32.totalorder %s64, %s67
      %p76 = scmp.eq.s32.totalorder %s24, 1
      %p77 = por %p75, %p76
      %p78 = scmp.ne.s32.totalorder %s67, %s68
      %p79 = scmp.eq.s32.totalorder %s24, 0
      %p80 = por %p78, %p79
      %p81 = scmp.ne.s32.totalorder %s67, %s68
      %p82 = scmp.eq.s32.totalorder %s25, 1
      %p83 = por %p81, %p82
      %p85 = scmp.ne.s32.totalorder %s68, %s84
      %p86 = scmp.eq.s32.totalorder %s25, 0
      %p87 = por %p85, %p86
      %s88 = ssub.s32 %s26, %s38
      %p89 = scmp.eq.s32.totalorder %s88, 0
      %s91 = sadd.s32 %s90, 1
      %s92 = scalar_select %p89, %s90, %s91
      %p95 = pneg %p89
      %p96 = scmp.eq.s32.totalorder %s19, 1
      %p97 = por %p95, %p96
      %p98 = scmp.ne.s32.totalorder %s90, %s93
      %p99 = scmp.eq.s32.totalorder %s19, 0
      %p100 = por %p98, %p99
      %p101 = scmp.ne.s32.totalorder %s90, %s93
      %p102 = scmp.eq.s32.totalorder %s24, 1
      %p103 = por %p101, %p102
      %p104 = scmp.ne.s32.totalorder %s93, %s94
      %p105 = scmp.eq.s32.totalorder %s24, 0
      %p106 = por %p104, %p105
      %p107 = scmp.ne.s32.totalorder %s93, %s94
      %p108 = scmp.eq.s32.totalorder %s25, 1
      %p109 = por %p107, %p108
      %p111 = scmp.ne.s32.totalorder %s94, %s110
      %p112 = scmp.eq.s32.totalorder %s25, 0
      %p113 = por %p111, %p112
      %s114 = ssub.s32 %s26, %s38
      %s115 = ssub.s32 %s27, %s34
      %s116 = sor.u32 %s114, %s115
      %p117 = scmp.eq.s32.totalorder %s116, 0
      %s119 = sadd.s32 %s118, 1
      %s120 = scalar_select %p117, %s118, %s119
      %p123 = pneg %p117
      %p124 = scmp.eq.s32.totalorder %s19, 1
      %p125 = por %p123, %p124
      %p126 = scmp.ne.s32.totalorder %s118, %s121
      %p127 = scmp.eq.s32.totalorder %s19, 0
      %p128 = por %p126, %p127
      %p129 = scmp.ne.s32.totalorder %s118, %s121
      %p130 = scmp.eq.s32.totalorder %s24, 1
      %p131 = por %p129, %p130
      %p132 = scmp.ne.s32.totalorder %s121, %s122
      %p133 = scmp.eq.s32.totalorder %s24, 0
      %p134 = por %p132, %p133
      %p135 = scmp.ne.s32.totalorder %s121, %s122
      %p136 = scmp.eq.s32.totalorder %s25, 1
      %p137 = por %p135, %p136
      %p139 = scmp.ne.s32.totalorder %s122, %s138
      %p140 = scmp.eq.s32.totalorder %s25, 0
      %p141 = por %p139, %p140
      %p142 = scmp.le.s32.totalorder 1, %s19
      %p143 = scmp.lt.s32.totalorder %s19, 3
      %p144 = pnand %p142, %p143
      %p145 = pneg %p144
      // Predicated region
      $region9: #{tpu_custom_call.1} parent=5 // pred_check
        _
      $region10: #{tpu_custom_call.1} parent=5 // pred_check_branch
        %147 = sbr.rel (%p144) target = $region12
      $region11: #{tpu_custom_call.1} parent=5 // pred_region
        %s148 = ssub.s32 %s19, 1
        // Predicated region
        $region13: #{tpu_custom_call.1} parent=11 // pred_check
          %p149 = pneg %p52
        $region14: #{tpu_custom_call.1} parent=11 // pred_check_branch
          %151 = sbr.rel (%p149) target = $region16
        $region15: #{tpu_custom_call.1} parent=11 // pred_region
          _
        $region16: #{tpu_custom_call.1} parent=11 // pred_fallthru
          _
      $region12: #{tpu_custom_call.1} parent=5 // pred_fallthru
        _
      %p152 = scmp.lt.s32.totalorder %s19, 2
      // Predicated region
      $region17: #{tpu_custom_call.1} parent=5 // pred_check
        %p153 = pneg %p152
      $region18: #{tpu_custom_call.1} parent=5 // pred_check_branch
        %155 = sbr.rel (%p153) target = $region20
      $region19: #{tpu_custom_call.1} parent=5 // pred_region
        // Predicated region
        $region21: #{tpu_custom_call.1} parent=19 // pred_check
          %p156 = pneg %p74
        $region22: #{tpu_custom_call.1} parent=19 // pred_check_branch
          %158 = sbr.rel (%p156) target = $region24
        $region23: #{tpu_custom_call.1} parent=19 // pred_region
          %s159 = sand.u32 %s64, 1
          %s160 = scalar_lea.sflag [#allocation4], %s159
          %s161 = sand.u32 %s64, 1
          %s162 = smul.addr %s161, 8
          %s163 = scalar_lea.vmem [#allocation3], %s162
          %s165 = ssub.s32 128, 128
          %166 = vsyncadd %s160, %s165
          %s167 = smul.addr %s27, 2
          %s168 = smul.addr %s26, 2
          %s169 = sadd.s32 %s167, %s168
          %s170 = smul.addr %s169, 64
          %s171 = scalar_lea.hbm %s1, %s170
          %s173 = sshll.u32 %s163, 4
          %s174 = int_to_ptr.vmem [resolvable:$true] %s173
          %176 = dma.hbm_to_vmem [thread:$0]  %s171, 128, %s174, %s160
        $region24: #{tpu_custom_call.1} parent=19 // pred_fallthru
          _
        // Predicated region
        $region25: #{tpu_custom_call.1} parent=19 // pred_check
          %p177 = pneg %p100
        $region26: #{tpu_custom_call.1} parent=19 // pred_check_branch
          %179 = sbr.rel (%p177) target = $region28
        $region27: #{tpu_custom_call.1} parent=19 // pred_region
          %s180 = sand.u32 %s90, 1
          %s181 = scalar_lea.sflag [#allocation7], %s180
          %s182 = sand.u32 %s90, 1
          %s183 = smul.addr %s182, 2
          %s184 = scalar_lea.vmem [#allocation6], %s183
          %s186 = ssub.s32 32, 32
          %187 = vsyncadd %s181, %s186
          %s188 = smul.addr %s26, 2
          %s189 = smul.addr %s188, 16
          %s190 = scalar_lea.hbm %s2, %s189
          %s192 = sshll.u32 %s184, 4
          %s193 = int_to_ptr.vmem [resolvable:$true] %s192
          %195 = dma.hbm_to_vmem [thread:$0]  %s190, 32, %s193, %s181
        $region28: #{tpu_custom_call.1} parent=19 // pred_fallthru
          _
      $region20: #{tpu_custom_call.1} parent=5 // pred_fallthru
        _
      %p196 = scmp.le.s32.totalorder 1, %s19
      %p197 = scmp.lt.s32.totalorder %s19, 3
      %p198 = pnand %p196, %p197
      %p199 = pneg %p198
      // Predicated region
      $region29: #{tpu_custom_call.1} parent=5 // pred_check
        _
      $region30: #{tpu_custom_call.1} parent=5 // pred_check_branch
        %201 = sbr.rel (%p198) target = $region32
      $region31: #{tpu_custom_call.1} parent=5 // pred_region
        %s202 = ssub.s32 %s19, 1
        %s203 = sand.u32 %s67, 1
        %s204 = scalar_lea.sflag [#allocation4], %s203
        %s205 = sand.u32 %s67, 1
        %s206 = smul.addr %s205, 8
        %s207 = scalar_lea.vmem [#allocation3], %s206
        // Predicated region
        $region33: #{tpu_custom_call.1} parent=31 // pred_check
          %p208 = pneg %p80
        $region34: #{tpu_custom_call.1} parent=31 // pred_check_branch
          %210 = sbr.rel (%p208) target = $region36
        $region35: #{tpu_custom_call.1} parent=31 // pred_region
          %211 = dma.done %s204, 128
        $region36: #{tpu_custom_call.1} parent=31 // pred_fallthru
          _
        %s212 = sand.u32 %s93, 1
        %s213 = scalar_lea.sflag [#allocation7], %s212
        %s214 = sand.u32 %s93, 1
        %s215 = smul.addr %s214, 2
        %s216 = scalar_lea.vmem [#allocation6], %s215
        // Predicated region
        $region37: #{tpu_custom_call.1} parent=31 // pred_check
          %p217 = pneg %p106
        $region38: #{tpu_custom_call.1} parent=31 // pred_check_branch
          %219 = sbr.rel (%p217) target = $region40
        $region39: #{tpu_custom_call.1} parent=31 // pred_region
          %220 = dma.done %s213, 32
        $region40: #{tpu_custom_call.1} parent=31 // pred_fallthru
          _
        %p221 = pneg %p52
        %p222 = pneg %p49
        %s223 = sand.u32 %s67, 1
        %s224 = scalar_lea.sflag [#allocation4], %s223
        %s225 = sand.u32 %s67, 1
        %s226 = smul.addr %s225, 8
        %s227 = scalar_lea.vmem [#allocation3], %s226
        %p228 = pneg %p80
        %p229 = pneg %p77
        %s230 = sand.u32 %s93, 1
        %s231 = scalar_lea.sflag [#allocation7], %s230
        %s232 = sand.u32 %s93, 1
        %s233 = smul.addr %s232, 2
        %s234 = scalar_lea.vmem [#allocation6], %s233
        %p235 = pneg %p106
        %p236 = pneg %p103
        %p237 = pneg %p134
        %p238 = pneg %p131
        %s239 = sand.u32 %s121, 1
        %s240 = scalar_lea.sflag [#allocation5], %s239
        %s241 = sand.u32 %s121, 1
        %s242 = smul.addr %s241, 8
        %s243 = scalar_lea.vmem [#allocation8], %s242
        %v244 = vld [vmem:[%s207] sm:$0xff]
        %v245 = vld [vmem:[%s216] sm:$0x3]
        %s246 = sld [smem:[#allocation2]]
        %v247 = vstv %s246
        %v248 = vmul.f32 %v247, %v245
        %v250 = vlaneseq
        %v251 = vshrl.u32 %v250, 7
        %v252 = vsub.s32 0, %v251
        %v253 = vrot.slane %v248, %v252
        %v254 = vlaneseq
        %v255 = vshrl.u32 %v254, 7
        %v256 = vsub.s32 1, %v255
        %v257 = vrot.slane %v248, %v256
        %v258 = vcombine.low %v253, %v257
        %v260 = vadd.f32 %v244, %v258
        %261 = vst [vmem:[%s243] sm:$0xff] %v260
        %s262 = sand.u32 %s121, 1
        %s263 = scalar_lea.sflag [#allocation5], %s262
        %s264 = sand.u32 %s121, 1
        %s265 = smul.addr %s264, 8
        %s266 = scalar_lea.vmem [#allocation8], %s265
        // Predicated region
        $region41: #{tpu_custom_call.1} parent=31 // pred_check
          %p267 = pneg %p131
        $region42: #{tpu_custom_call.1} parent=31 // pred_check_branch
          %269 = sbr.rel (%p267) target = $region44
        $region43: #{tpu_custom_call.1} parent=31 // pred_region
          %s271 = ssub.s32 128, 128
          %272 = vsyncadd %s263, %s271
          %s273 = smul.addr %s29, 2
          %s274 = smul.addr %s28, 2
          %s275 = sadd.s32 %s273, %s274
          %s276 = smul.addr %s275, 64
          %s277 = scalar_lea.hbm %s3, %s276
          %s279 = sshll.u32 %s266, 4
          %s280 = int_to_ptr.vmem [resolvable:$true] %s279
          %282 = dma.vmem_to_hbm [thread:$0]  %s280, 128, %s277, %s263
        $region44: #{tpu_custom_call.1} parent=31 // pred_fallthru
          _
      $region32: #{tpu_custom_call.1} parent=5 // pred_fallthru
        _
      %p283 = scmp.le.s32.totalorder 2, %s19
      // Predicated region
      $region45: #{tpu_custom_call.1} parent=5 // pred_check
        %p284 = pneg %p283
      $region46: #{tpu_custom_call.1} parent=5 // pred_check_branch
        %286 = sbr.rel (%p284) target = $region48
      $region47: #{tpu_custom_call.1} parent=5 // pred_region
        %s287 = ssub.s32 %s19, 2
        // Predicated region
        $region49: #{tpu_custom_call.1} parent=47 // pred_check
          %p288 = pneg %p137
        $region50: #{tpu_custom_call.1} parent=47 // pred_check_branch
          %290 = sbr.rel (%p288) target = $region52
        $region51: #{tpu_custom_call.1} parent=47 // pred_region
          %s291 = sand.u32 %s122, 1
          %s292 = scalar_lea.sflag [#allocation5], %s291
          %s293 = sand.u32 %s122, 1
          %s294 = smul.addr %s293, 8
          %s295 = scalar_lea.vmem [#allocation8], %s294
          %296 = dma.done %s292, 128
        $region52: #{tpu_custom_call.1} parent=47 // pred_fallthru
          _
      $region48: #{tpu_custom_call.1} parent=5 // pred_fallthru
        _
    $region6: #{tpu_custom_call.1} parent=1 // loop_footer
      %s23 = sadd.s32 1, %s19
    $region7: #{tpu_custom_call.1} parent=1 // loop_footer_branch
      %18 = sbr.rel target = $region3
    $region8: #{tpu_custom_call.1} parent=1 // loop_exit
      _
    %297 = vsyncpa [#allocation4], 1
    %s298 = scalar_lea.sflag [#allocation4], 1
    %299 = vsyncpa %s298, 1
    %300 = vsyncpa [#allocation7], 1
    %s301 = scalar_lea.sflag [#allocation7], 1
    %302 = vsyncpa %s301, 1
    %303 = vsyncpa [#allocation5], 1
    %s304 = scalar_lea.sflag [#allocation5], 1
    %305 = vsyncpa %s304, 1

</llo_original>
